<compile_context>
chip_gen: v5e
topology: v5e:2x2
jax: 0.10.0
libtpu: 0.0.40
codegen_flags: <defaults>
</compile_context>

<pallas_src>
import jax
import jax.numpy as jnp
from jax.experimental import pallas as pl
from jax.experimental.pallas import tpu as pltpu

LANE = 512            # lane-dense last dim (multiple of 128) -> unmasked vst stores
MAX_BLOCK_ROWS = 1024  # 1024x512 f32 block = 2 MiB/buffer; 3 buffers, double-buffered ~= 12 MiB
                       # (safe under v7x's 64 MiB VMEM / 32 MiB scoped default)


def ibp_forward_kernel(nu_ref, u_ref, out_ref):
    nu = nu_ref[...]
    u = u_ref[...]
    # log(probs) - log(1 - probs) with probs = 0.5 * (1 + sigmoid(nu))
    logit_diff = jnp.log1p(2.0 * jnp.exp(nu))
    # difference of two iid Gumbel draws ~ Logistic(0, 1)
    logistic = jnp.log(u) - jnp.log1p(-u)
    # hard=True forward value: one-hot argmax over {p, 1-p}; temperature > 0 drops out.
    out_ref[...] = jnp.where(logit_diff + logistic >= 0.0, 1.0, 0.0).astype(out_ref.dtype)


def ibp_forward(nu, key, temperature=0.1):
    """Forward pass of IBP: hard Gumbel-softmax Bernoulli sample with nu's shape."""
    assert temperature > 0.0  # forward value is tau-invariant only for tau > 0
    n_objects, n_features = nu.shape
    total = n_objects * n_features

    # Present a lane-dense 2-D slab to the kernel (op is purely elementwise, layout is free).
    n_rows = pl.cdiv(total, LANE)
    block_rows = min(MAX_BLOCK_ROWS, ((n_rows + 7) // 8) * 8)
    padded_rows = pl.cdiv(n_rows, block_rows) * block_rows
    padded_total = padded_rows * LANE

    nu_flat = jnp.pad(nu.astype(jnp.float32).reshape(-1), (0, padded_total - total))
    nu2 = nu_flat.reshape(padded_rows, LANE)

    # TODO(synk): on real hardware pltpu.prng_seed/prng_random_bits inside the kernel
    # (with a per-block seed) would avoid streaming the uniforms from HBM, but those
    # primitives do not lower in interpret mode, so noise is generated host-side here.
    u2 = jax.random.uniform(
        key, (padded_rows, LANE), dtype=jnp.float32, minval=1e-6, maxval=1.0 - 1e-6
    )

    grid = (padded_rows // block_rows,)
    out2 = pl.pallas_call(
        ibp_forward_kernel,
        out_shape=jax.ShapeDtypeStruct((padded_rows, LANE), jnp.float32),
        grid=grid,
        in_specs=[
            pl.BlockSpec((block_rows, LANE), lambda i: (i, 0)),  # nu tile
            pl.BlockSpec((block_rows, LANE), lambda i: (i, 0)),  # uniform noise tile
        ],
        out_specs=pl.BlockSpec((block_rows, LANE), lambda i: (i, 0)),
        compiler_params=pltpu.CompilerParams(dimension_semantics=("parallel",)),
    )(nu2, u2)

    return out2.reshape(-1)[:total].reshape(n_objects, n_features)


def make_ibp_params(key, n_objects, n_features, alpha=1.0):
    """Deterministic parameter init mirroring IBP.initialize_params (shapes only)."""
    k_nu, k_tau = jax.random.split(key)
    nu = jax.random.normal(k_nu, (n_objects, n_features), dtype=jnp.float32)

    # q_tau_ is not used by forward(); initialized for completeness.
    alpha_K = alpha / n_features
    q_tau = jnp.ones((2, n_features), dtype=jnp.float32)
    q_tau = q_tau.at[0, :].set(alpha_K)
    q_tau = q_tau + 1.5 * min(1.0, alpha_K) * (
        jax.random.uniform(k_tau, (2, n_features), dtype=jnp.float32) - 1.5
    )
    return nu, q_tau


if __name__ == "__main__":
    n_objects, n_features = 8, 32
    alpha, temperature = 1.0, 0.1

    key = jax.random.PRNGKey(0)
    k_init, k_noise = jax.random.split(key)
    nu, q_tau = make_ibp_params(k_init, n_objects, n_features, alpha)

    out = ibp_forward(nu, k_noise, temperature)
    out = jax.block_until_ready(out)

    assert out.shape == (n_objects, n_features)
    assert out.dtype == jnp.float32
    # hard Gumbel-softmax forward values are exactly 0 or 1
    assert bool(jnp.all((out == 0.0) | (out == 1.0)))

    print("KERNEL_OK")
</pallas_src>

<mosaic_0001>
module attributes {stable_mosaic.version = 11 : i64} {
  func.func @ibp_forward_kernel(%arg0: i32, %arg1: memref<8x512xf32, #tpu.memory_space<vmem>>, %arg2: memref<8x512xf32, #tpu.memory_space<vmem>>, %arg3: memref<8x512xf32, #tpu.memory_space<vmem>>) attributes {dimension_semantics = [#tpu.dimension_semantics<parallel>], iteration_bounds = array<i64: 1>, scalar_prefetch = 0 : i64, scratch_operands = 0 : i64, tpu.core_type = #tpu.core_type<tc>, window_params = [{transform_indices = @transform_0, window_bounds = array<i64: 8, 512>}, {transform_indices = @transform_1, window_bounds = array<i64: 8, 512>}, {transform_indices = @transform_2, window_bounds = array<i64: 8, 512>}]} {
    %c0 = arith.constant 0 : index
    %c0_0 = arith.constant 0 : index
    %0 = vector.load %arg1[%c0, %c0_0] : memref<8x512xf32, #tpu.memory_space<vmem>>, vector<8x512xf32>
    %c0_1 = arith.constant 0 : index
    %c0_2 = arith.constant 0 : index
    %1 = vector.load %arg2[%c0_1, %c0_2] : memref<8x512xf32, #tpu.memory_space<vmem>>, vector<8x512xf32>
    %2 = math.exp %0 : vector<8x512xf32>
    %cst = arith.constant 2.000000e+00 : f32
    %3 = vector.broadcast %cst : f32 to vector<8x512xf32>
    %4 = arith.mulf %3, %2 : vector<8x512xf32>
    %5 = math.log1p %4 : vector<8x512xf32>
    %6 = math.log %1 : vector<8x512xf32>
    %cst_3 = arith.constant 0.000000e+00 : f32
    %7 = vector.broadcast %cst_3 : f32 to vector<8x512xf32>
    %8 = arith.subf %7, %1 : vector<8x512xf32>
    %9 = math.log1p %8 : vector<8x512xf32>
    %10 = arith.subf %6, %9 : vector<8x512xf32>
    %11 = arith.addf %5, %10 : vector<8x512xf32>
    %cst_4 = arith.constant 0.000000e+00 : f32
    %12 = vector.broadcast %cst_4 : f32 to vector<8x512xf32>
    %13 = arith.cmpf oge, %11, %12 : vector<8x512xf32>
    %cst_5 = arith.constant 1.000000e+00 : f32
    %cst_6 = arith.constant 0.000000e+00 : f32
    %14 = vector.broadcast %cst_5 : f32 to vector<8x512xf32>
    %15 = vector.broadcast %cst_6 : f32 to vector<8x512xf32>
    %16 = arith.select %13, %14, %15 : vector<8x512xi1>, vector<8x512xf32>
    %c0_7 = arith.constant 0 : index
    %c0_8 = arith.constant 0 : index
    %17 = vector.load %arg3[%c0_7, %c0_8] : memref<8x512xf32, #tpu.memory_space<vmem>>, vector<8x512xf32>
    tpu.vector_store %arg3[%c0_7, %c0_8], %16 {strides = array<i32>} : memref<8x512xf32, #tpu.memory_space<vmem>>, vector<8x512xf32>,
    return
  }
  func.func @transform_0(%arg0: i32) -> (i32, i32) {
    %c0_i32 = arith.constant 0 : i32
    %c0_i32_0 = arith.constant 0 : i32
    return %arg0, %c0_i32 : i32, i32
  }
  func.func @transform_1(%arg0: i32) -> (i32, i32) {
    %c0_i32 = arith.constant 0 : i32
    %c0_i32_0 = arith.constant 0 : i32
    return %arg0, %c0_i32 : i32, i32
  }
  func.func @transform_2(%arg0: i32) -> (i32, i32) {
    %c0_i32 = arith.constant 0 : i32
    %c0_i32_0 = arith.constant 0 : i32
    return %arg0, %c0_i32 : i32, i32
  }
}

</mosaic_0001>

<llo_original>
// kernel: tpu_custom_call.1
$region0: #{tpu_custom_call.1}
  #allocation0 [shape = 'u32[]', space=smem, size = 0x4, offset = 0x4, fixed_abs, tag = 'smem constant byte address 0x4 - core index']
  #allocation1 [shape = 'u32[72,128]{1,0:T(1,128)}', space=vmem, size = 0x9000, scoped, tag = 'internal scratch']
  %s0 = inlined_call_operand.hbm [shape: f32[8,512], index: 0, kind: input, shape index: {}]
  %s1 = inlined_call_operand.hbm [shape: f32[8,512], index: 1, kind: input, shape index: {}]
  %s2 = inlined_call_operand.hbm [shape: f32[8,512], index: 2, kind: output, shape index: {}]
  %s3 = sld [smem:[#allocation0]]
  $region26: #{tpu_custom_call.1} parent=0
    _
  %s5 = ssub.s32 1, %s3
  %s6 = scalar_select 0, %s5, %s3
  $region1: #{tpu_custom_call.1} parent=0
    #allocation2 [shape = 'u8[16384]{0}', space=vmem, size = 0x4000, scoped, tag = 'input window, operand 0, single buffered']
    #allocation3 [shape = 's32[1]{0}', space=sflag, size = 0x4, scoped, tag = 'scoped memory for tpu_custom_call.1']
    #allocation4 [shape = 's32[1]{0}', space=sflag, size = 0x4, scoped, tag = 'scoped memory for tpu_custom_call.1']
    #allocation5 [shape = 'u8[16384]{0}', space=vmem, size = 0x4000, scoped, tag = 'input window, operand 1, single buffered']
    #allocation6 [shape = 's32[1]{0}', space=sflag, size = 0x4, scoped, tag = 'scoped memory for tpu_custom_call.1']
    #allocation7 [shape = 'u8[16384]{0}', space=vmem, size = 0x4000, scoped, tag = 'output window, operand 0, single buffered']
    %7 = vsyncpa [#allocation3], 0
    %8 = vsyncpa [#allocation6], 0
    %9 = vsyncpa [#allocation4], 0
    // Predicated region
    $region2: #{tpu_custom_call.1} parent=1 // pred_check
      _
    $region3: #{tpu_custom_call.1} parent=1 // pred_check_branch
      %11 = sbr.rel (0) target = $region5
    $region4: #{tpu_custom_call.1} parent=1 // pred_region
      %13 = vsyncadd [#allocation3], 0
      %s15 = sshll.u32 %s0, 4
      %s16 = int_to_ptr.hbm [resolvable:$true] %s15
      %s17 = sshll.u32 [#allocation2], 4
      %s18 = int_to_ptr.vmem [resolvable:$true] %s17
      %20 = dma.hbm_to_vmem [thread:$0]  %s16, 512, %s18, [#allocation3]
    $region5: #{tpu_custom_call.1} parent=1 // pred_fallthru
      _
    // Predicated region
    $region6: #{tpu_custom_call.1} parent=1 // pred_check
      _
    $region7: #{tpu_custom_call.1} parent=1 // pred_check_branch
      %22 = sbr.rel (0) target = $region9
    $region8: #{tpu_custom_call.1} parent=1 // pred_region
      %24 = vsyncadd [#allocation6], 0
      %s26 = sshll.u32 %s1, 4
      %s27 = int_to_ptr.hbm [resolvable:$true] %s26
      %s28 = sshll.u32 [#allocation5], 4
      %s29 = int_to_ptr.vmem [resolvable:$true] %s28
      %31 = dma.hbm_to_vmem [thread:$0]  %s27, 512, %s29, [#allocation6]
    $region9: #{tpu_custom_call.1} parent=1 // pred_fallthru
      _
    // Predicated region
    $region10: #{tpu_custom_call.1} parent=1 // pred_check
      _
    $region11: #{tpu_custom_call.1} parent=1 // pred_check_branch
      %33 = sbr.rel (0) target = $region13
    $region12: #{tpu_custom_call.1} parent=1 // pred_region
      %35 = dma.done [#allocation3], 512
    $region13: #{tpu_custom_call.1} parent=1 // pred_fallthru
      _
    // Predicated region
    $region14: #{tpu_custom_call.1} parent=1 // pred_check
      _
    $region15: #{tpu_custom_call.1} parent=1 // pred_check_branch
      %37 = sbr.rel (0) target = $region17
    $region16: #{tpu_custom_call.1} parent=1 // pred_region
      %39 = dma.done [#allocation6], 512
    $region17: #{tpu_custom_call.1} parent=1 // pred_fallthru
      _
    %v40 = vld [vmem:[#allocation2] sm:$0xff]
    %v41 = vld [vmem:[#allocation2 + $0x8] sm:$0xff]
    %v42 = vld [vmem:[#allocation2 + $0x10] sm:$0xff]
    %v43 = vld [vmem:[#allocation2 + $0x18] sm:$0xff]
    %v44 = vld [vmem:[#allocation5] sm:$0xff]
    %v45 = vld [vmem:[#allocation5 + $0x8] sm:$0xff]
    %v46 = vld [vmem:[#allocation5 + $0x10] sm:$0xff]
    %v47 = vld [vmem:[#allocation5 + $0x18] sm:$0xff]
    %v48 = vmul.f32 %v40, 1.442695
    %v49 = vpow.pop %v48
    %v50 = vmul.f32 %v41, 1.442695
    %v51 = vpow.pop %v50
    %v52 = vmul.f32 %v42, 1.442695
    %v53 = vpow.pop %v52
    %v54 = vmul.f32 %v43, 1.442695
    %v55 = vpow.pop %v54
    %v56 = vmul.f32 %v49, 2.0
    %v57 = vmul.f32 %v51, 2.0
    %v58 = vmul.f32 %v53, 2.0
    %v59 = vmul.f32 %v55, 2.0
    %v60 = vadd.f32 %v56, 1.0
    %v61 = vlog2.pop %v60
    %v62 = vmul.f32 %v61, 0.6931472
    %v63 = vmul.f32 -0.5, %v56
    %v64 = vadd.f32 %v63, 1.0
    %v65 = vmul.f32 %v64, %v56
    %v66 = vand.u32 2147483647, %v56
    %vm67 = vcmp.lt.f32.partialorder %v66, 0.0004427343
    %v68 = vsel %vm67, %v65, %v62
    %v69 = vadd.f32 %v57, 1.0
    %v70 = vlog2.pop %v69
    %v71 = vmul.f32 %v70, 0.6931472
    %v72 = vmul.f32 -0.5, %v57
    %v73 = vadd.f32 %v72, 1.0
    %v74 = vmul.f32 %v73, %v57
    %v75 = vand.u32 2147483647, %v57
    %vm76 = vcmp.lt.f32.partialorder %v75, 0.0004427343
    %v77 = vsel %vm76, %v74, %v71
    %v78 = vadd.f32 %v58, 1.0
    %v79 = vlog2.pop %v78
    %v80 = vmul.f32 %v79, 0.6931472
    %v81 = vmul.f32 -0.5, %v58
    %v82 = vadd.f32 %v81, 1.0
    %v83 = vmul.f32 %v82, %v58
    %v84 = vand.u32 2147483647, %v58
    %vm85 = vcmp.lt.f32.partialorder %v84, 0.0004427343
    %v86 = vsel %vm85, %v83, %v80
    %v87 = vadd.f32 %v59, 1.0
    %v88 = vlog2.pop %v87
    %v89 = vmul.f32 %v88, 0.6931472
    %v90 = vmul.f32 -0.5, %v59
    %v91 = vadd.f32 %v90, 1.0
    %v92 = vmul.f32 %v91, %v59
    %v93 = vand.u32 2147483647, %v59
    %vm94 = vcmp.lt.f32.partialorder %v93, 0.0004427343
    %v95 = vsel %vm94, %v92, %v89
    %v96 = vlog2.pop %v44
    %v97 = vmul.f32 %v96, 0.6931472
    %v98 = vlog2.pop %v45
    %v99 = vmul.f32 %v98, 0.6931472
    %v100 = vlog2.pop %v46
    %v101 = vmul.f32 %v100, 0.6931472
    %v102 = vlog2.pop %v47
    %v103 = vmul.f32 %v102, 0.6931472
    %v104 = vsub.f32 0.0, %v44
    %v105 = vsub.f32 0.0, %v45
    %v106 = vsub.f32 0.0, %v46
    %v107 = vsub.f32 0.0, %v47
    %v108 = vadd.f32 %v104, 1.0
    %v109 = vlog2.pop %v108
    %v110 = vmul.f32 %v109, 0.6931472
    %v111 = vmul.f32 -0.5, %v104
    %v112 = vadd.f32 %v111, 1.0
    %v113 = vmul.f32 %v112, %v104
    %v114 = vand.u32 2147483647, %v104
    %vm115 = vcmp.lt.f32.partialorder %v114, 0.0004427343
    %v116 = vsel %vm115, %v113, %v110
    %v117 = vadd.f32 %v105, 1.0
    %v118 = vlog2.pop %v117
    %v119 = vmul.f32 %v118, 0.6931472
    %v120 = vmul.f32 -0.5, %v105
    %v121 = vadd.f32 %v120, 1.0
    %v122 = vmul.f32 %v121, %v105
    %v123 = vand.u32 2147483647, %v105
    %vm124 = vcmp.lt.f32.partialorder %v123, 0.0004427343
    %v125 = vsel %vm124, %v122, %v119
    %v126 = vadd.f32 %v106, 1.0
    %v127 = vlog2.pop %v126
    %v128 = vmul.f32 %v127, 0.6931472
    %v129 = vmul.f32 -0.5, %v106
    %v130 = vadd.f32 %v129, 1.0
    %v131 = vmul.f32 %v130, %v106
    %v132 = vand.u32 2147483647, %v106
    %vm133 = vcmp.lt.f32.partialorder %v132, 0.0004427343
    %v134 = vsel %vm133, %v131, %v128
    %v135 = vadd.f32 %v107, 1.0
    %v136 = vlog2.pop %v135
    %v137 = vmul.f32 %v136, 0.6931472
    %v138 = vmul.f32 -0.5, %v107
    %v139 = vadd.f32 %v138, 1.0
    %v140 = vmul.f32 %v139, %v107
    %v141 = vand.u32 2147483647, %v107
    %vm142 = vcmp.lt.f32.partialorder %v141, 0.0004427343
    %v143 = vsel %vm142, %v140, %v137
    %v144 = vsub.f32 %v97, %v116
    %v145 = vsub.f32 %v99, %v125
    %v146 = vsub.f32 %v101, %v134
    %v147 = vsub.f32 %v103, %v143
    %v148 = vadd.f32 %v68, %v144
    %v149 = vadd.f32 %v77, %v145
    %v150 = vadd.f32 %v86, %v146
    %v151 = vadd.f32 %v95, %v147
    %vm152 = vcmp.ge.f32.partialorder %v148, 0.0
    %vm153 = vcmp.ge.f32.partialorder %v149, 0.0
    %vm154 = vcmp.ge.f32.partialorder %v150, 0.0
    %vm155 = vcmp.ge.f32.partialorder %v151, 0.0
    %v156 = vsel %vm152, 1.0, 0.0
    %v157 = vsel %vm153, 1.0, 0.0
    %v158 = vsel %vm154, 1.0, 0.0
    %v159 = vsel %vm155, 1.0, 0.0
    %160 = vst [vmem:[#allocation7] sm:$0xff] %v156
    %161 = vst [vmem:[#allocation7 + $0x8] sm:$0xff] %v157
    %162 = vst [vmem:[#allocation7 + $0x10] sm:$0xff] %v158
    %163 = vst [vmem:[#allocation7 + $0x18] sm:$0xff] %v159
    // Predicated region
    $region18: #{tpu_custom_call.1} parent=1 // pred_check
      _
    $region19: #{tpu_custom_call.1} parent=1 // pred_check_branch
      %165 = sbr.rel (0) target = $region21
    $region20: #{tpu_custom_call.1} parent=1 // pred_region
      %167 = vsyncadd [#allocation4], 0
      %s169 = sshll.u32 [#allocation7], 4
      %s170 = int_to_ptr.vmem [resolvable:$true] %s169
      %s171 = sshll.u32 %s2, 4
      %s172 = int_to_ptr.hbm [resolvable:$true] %s171
      %174 = dma.vmem_to_hbm [thread:$0]  %s170, 512, %s172, [#allocation4]
    $region21: #{tpu_custom_call.1} parent=1 // pred_fallthru
      _
    // Predicated region
    $region22: #{tpu_custom_call.1} parent=1 // pred_check
      _
    $region23: #{tpu_custom_call.1} parent=1 // pred_check_branch
      %176 = sbr.rel (0) target = $region25
    $region24: #{tpu_custom_call.1} parent=1 // pred_region
      %178 = dma.done [#allocation4], 512
    $region25: #{tpu_custom_call.1} parent=1 // pred_fallthru
      _
    %179 = vsyncpa [#allocation3], 1
    %180 = vsyncpa [#allocation6], 1
    %181 = vsyncpa [#allocation4], 1

</llo_original>
